<compile_context>
chip_gen: v7x
topology: tpu7x:2x2x1
jax: 0.10.0
libtpu: 0.0.40
codegen_flags: <defaults>
</compile_context>

<pallas_src>
import functools

import jax
import jax.numpy as jnp
from jax.experimental import pallas as pl
from jax.experimental.pallas import tpu as pltpu


def _round_up(x, m):
    return -(-x // m) * m


def _cdiv(a, b):
    return -(-a // b)


def _sublane(dtype):
    # rows per (sublane, lane) VMEM tile: 8 for 4-byte, 16 for 2-byte, 32 for 1-byte.
    return max(8, 32 // jnp.dtype(dtype).itemsize)


def _vmem_budget_bytes():
    """Conservative scoped-VMEM budget for this kernel (v7x-safe fallback)."""
    cap = None
    try:
        info = pltpu.get_tpu_info()
        cap = getattr(info, "vmem_capacity_bytes", None)
    except Exception:
        cap = None
    if not cap or cap <= 0:
        cap = 64 * 1024 * 1024  # v7x physical per-TC VMEM (smallest across gens)
    # Leave headroom below physical capacity for compiler scratch / spills.
    return min(int(cap) * 3 // 4, 96 * 1024 * 1024)


def _choose_tile_n(N, K, D, KD, tile_o, fused, in_dt, w_bytes, out_bytes,
                   bias_bytes, budget, use_bias, row_align):
    """Largest pipeline-friendly node tile that fits the VMEM budget."""
    in_bytes = jnp.dtype(in_dt).itemsize
    o_lanes = _round_up(tile_o, 128)
    k_rows = KD if fused else D

    # Resident (double-buffered) weight + optional bias.
    fixed = 2 * _round_up(k_rows, _sublane(in_dt)) * o_lanes * w_bytes
    if use_bias:
        fixed += 2 * 8 * o_lanes * bias_bytes

    # Per-node-row cost: double-buffered input tile + double-buffered output tile
    # + f32 temporaries (matmul result, and the aggregated row on the reduce path).
    if fused:
        in_row = _round_up(KD, 128) * in_bytes
        tmp_row = o_lanes * 4
    else:
        in_row = _round_up(K, _sublane(in_dt)) * _round_up(D, 128) * in_bytes
        tmp_row = o_lanes * 4 + _round_up(D, 128) * 4
    per_row = 2 * in_row + 2 * o_lanes * out_bytes + tmp_row

    avail = max(budget - fixed, 8 * per_row)
    t = int(avail // per_row)
    if t >= 128:
        t = (t // 128) * 128
    else:
        t = max(row_align, (t // row_align) * row_align)

    # Keep >= 8 grid steps on the node axis (>= 4 per TensorCore on v7x) whenever
    # N is big enough, so double-buffering overlaps DMA with compute on both cores.
    min_steps = 8
    if N >= min_steps * row_align:
        t = min(t, _round_up(_cdiv(N, min_steps), row_align))

    t = min(t, _round_up(N, row_align))
    return max(t, row_align)


def _neighbor_agg_kernel(*refs, fused, aggr_method, use_bias):
    """refs = (x_ref, w_ref[, b_ref], o_ref).

    fused path : x_ref (tile_n, K*D),   w_ref (K*D, tile_o)
    reduce path: x_ref (tile_n, K, D),  w_ref (D,   tile_o)
    b_ref      : (1, tile_o)            (only when use_bias)
    o_ref      : (tile_n, tile_o)
    """
    if use_bias:
        x_ref, w_ref, b_ref, o_ref = refs
    else:
        x_ref, w_ref, o_ref = refs
        b_ref = None

    if fused:
        # The K-sum (and the 1/K of "mean") rides the MXU contraction.
        aggr = x_ref[...]
    else:
        x = x_ref[...]                         # (tile_n, K, D)
        if aggr_method == "max":
            aggr = jnp.max(x, axis=1)          # one-pass sublane reduce, native dtype
        else:                                  # "sum" (mean already folded into weight)
            aggr = jnp.sum(x, axis=1, dtype=jnp.float32)

    # Weight is pre-promoted in the wrapper, so this cast only ever widens
    # (or is a no-op) -> bf16 inputs with bf16 weights stay native on the MXU.
    hidden = jnp.dot(aggr.astype(w_ref.dtype), w_ref[...],
                     preferred_element_type=jnp.float32)
    if use_bias:
        hidden = hidden + b_ref[...].astype(jnp.float32)
    o_ref[...] = hidden.astype(o_ref.dtype)


def neighbor_aggregator(neighbor_feature, weight, bias=None,
                        aggr_method="mean", tile_n=None):
    """Pallas implementation of NeighborAggregator.forward.

    neighbor_feature: (N, K, D)
    weight:           (D, O)
    bias:             (O,) or None
    returns:          (N, O)
    """
    if aggr_method not in ("mean", "sum", "max"):
        raise ValueError(
            "Unknown aggr type, expected sum, max, or mean, but got "
            f"{aggr_method}")

    N, K, D = neighbor_feature.shape
    Dw, O = weight.shape
    assert D == Dw
    use_bias = bias is not None

    in_dt = neighbor_feature.dtype
    compute_dt = jnp.promote_types(in_dt, weight.dtype)
    weight = weight.astype(compute_dt)
    out_dtype = compute_dt

    in_bytes = jnp.dtype(in_dt).itemsize
    w_bytes = jnp.dtype(compute_dt).itemsize
    out_bytes = jnp.dtype(out_dtype).itemsize
    bias_bytes = jnp.dtype(bias.dtype).itemsize if use_bias else 0

    budget = _vmem_budget_bytes()

    # mean == sum with 1/K folded into the (small) weight outside the hot loop.
    if aggr_method == "mean":
        weight = weight * (1.0 / K)
        kernel_aggr = "sum"
    else:
        kernel_aggr = aggr_method

    # Lane-dense output padding, but only when the inflation is <= 2x.  For tiny O
    # (e.g. 32) the 4x writeback growth outweighs the masked-store cost, so the
    # true width is kept (full-extent output block is legal).
    O_pad = _round_up(O, 128)
    if O_pad > 2 * O:
        O_pad = O
    if O_pad != O:
        weight = jnp.pad(weight, ((0, 0), (0, O_pad - O)))
        if use_bias:
            bias = jnp.pad(bias, (0, O_pad - O))

    # ---- compute-path selection --------------------------------------------
    KD = K * D
    fused = (
        kernel_aggr == "sum"
        and 2 * _round_up(KD, _sublane(compute_dt)) * _round_up(O_pad, 128) * w_bytes
        <= budget // 3
    )

    if fused:
        x_op = neighbor_feature.reshape(N, KD)        # free view of contiguous HBM
        w_op = jnp.tile(weight, (K, 1))               # (K*D, O_pad), already /K for mean
        k_rows = KD
    else:
        x_op = neighbor_feature
        w_op = weight
        k_rows = D
    b_op = bias.reshape(1, O_pad) if use_bias else None

    # ---- O tiling: cap the resident weight (~1/3 of budget; v7x 64 MiB VMEM) ---
    w_foot = 2 * _round_up(k_rows, _sublane(compute_dt)) * _round_up(O_pad, 128) * w_bytes
    if O_pad % 128 == 0 and w_foot > budget // 3:
        per_o = 2 * _round_up(k_rows, _sublane(compute_dt)) * 128 * w_bytes
        tile_o = min(O_pad, max(128, ((budget // 3) // per_o) * 128))
    else:
        tile_o = O_pad
    n_tiles_o = _cdiv(O_pad, tile_o)
    # For extremely large D with tiny O a D-reduction grid axis (with an f32 VMEM
    # accumulator) would be needed instead; typical GraphSAGE dims never hit that.

    # ---- node tile ----------------------------------------------------------
    row_align = max(_sublane(out_dtype), _sublane(in_dt))
    if tile_n is None:
        tile_n = _choose_tile_n(N, K, D, KD, tile_o, fused, in_dt, w_bytes,
                                out_bytes, bias_bytes, budget, use_bias, row_align)
    tile_n = max(row_align, min(_round_up(tile_n, row_align), _round_up(N, row_align)))

    grid = (_cdiv(N, tile_n), n_tiles_o)

    # ---- specs (input block index is constant across the inner O axis, so the
    #      dominant (N,K,D) stream is fetched once per node tile) --------------
    if fused:
        x_spec = pl.BlockSpec((tile_n, KD), lambda i, j: (i, 0))
    else:
        x_spec = pl.BlockSpec((tile_n, K, D), lambda i, j: (i, 0, 0))
    in_specs = [x_spec, pl.BlockSpec((k_rows, tile_o), lambda i, j: (0, j))]
    operands = [x_op, w_op]
    if use_bias:
        in_specs.append(pl.BlockSpec((1, tile_o), lambda i, j: (0, j)))
        operands.append(b_op)

    kernel = functools.partial(_neighbor_agg_kernel, fused=fused,
                               aggr_method=kernel_aggr, use_bias=use_bias)

    if fused:
        flops = 2 * N * KD * O_pad
    else:
        flops = 2 * N * D * O_pad + N * (K - 1) * D
    cost = pl.CostEstimate(
        flops=int(flops),
        transcendentals=0,
        bytes_accessed=int(N * KD * in_bytes
                           + k_rows * O_pad * w_bytes
                           + (O_pad * bias_bytes if use_bias else 0)
                           + N * O_pad * out_bytes),
    )

    out = pl.pallas_call(
        kernel,
        out_shape=jax.ShapeDtypeStruct((N, O_pad), out_dtype),
        grid_spec=pltpu.PrefetchScalarGridSpec(
            num_scalar_prefetch=0,
            grid=grid,
            in_specs=in_specs,
            out_specs=pl.BlockSpec((tile_n, tile_o), lambda i, j: (i, j)),
        ),
        compiler_params=pltpu.CompilerParams(
            dimension_semantics=("parallel", "arbitrary"),
            vmem_limit_bytes=budget,
        ),
        cost_estimate=cost,
    )(*operands)

    return out[:, :O] if O_pad != O else out


def reference(neighbor_feature, weight, bias=None, aggr_method="mean"):
    if aggr_method == "mean":
        aggr = jnp.mean(neighbor_feature, axis=1)
    elif aggr_method == "sum":
        aggr = jnp.sum(neighbor_feature, axis=1)
    elif aggr_method == "max":
        aggr = jnp.max(neighbor_feature, axis=1)
    else:
        raise ValueError(aggr_method)
    out = aggr @ weight
    if bias is not None:
        out = out + bias
    return out


if __name__ == "__main__":
    # Small, deterministic example shapes:
    #   num_nodes N = 16, num_neighbors K = 8, input_dim D = 32, output_dim O = 32
    N, K, D, O = 16, 8, 32, 32
    key = jax.random.PRNGKey(0)
    k_feat, k_w, k_b = jax.random.split(key, 3)

    neighbor_feature = jax.random.normal(k_feat, (N, K, D), dtype=jnp.float32)

    # kaiming_uniform_-style init for weight of shape (D, O):
    # torch computes fan_in = tensor.size(1) = O; bound = sqrt(6 / fan_in).
    bound = (6.0 / O) ** 0.5
    weight = jax.random.uniform(k_w, (D, O), minval=-bound, maxval=bound,
                                dtype=jnp.float32)
    bias = jax.random.normal(k_b, (O,), dtype=jnp.float32) * 0.1

    # Default module config: use_bias=False, aggr_method="mean" (fused MXU path).
    out = jax.block_until_ready(
        neighbor_aggregator(neighbor_feature, weight, None, aggr_method="mean"))
    ref = reference(neighbor_feature, weight, None, aggr_method="mean")
    assert out.shape == (N, O)
    assert jnp.allclose(out, ref, atol=1e-3, rtol=1e-3), "mean mismatch vs reference"

    # sum aggregation (fused MXU path, no 1/K scaling).
    out_sum = jax.block_until_ready(
        neighbor_aggregator(neighbor_feature, weight, None, aggr_method="sum"))
    ref_sum = reference(neighbor_feature, weight, None, aggr_method="sum")
    assert jnp.allclose(out_sum, ref_sum, atol=1e-3, rtol=1e-3), "sum mismatch vs reference"

    # max aggregation + bias (one-pass reduce path).
    out_max = jax.block_until_ready(
        neighbor_aggregator(neighbor_feature, weight, bias, aggr_method="max"))
    ref_max = reference(neighbor_feature, weight, bias, aggr_method="max")
    assert jnp.allclose(out_max, ref_max, atol=1e-3, rtol=1e-3), "max mismatch vs reference"

    print("KERNEL_OK")
</pallas_src>

<mosaic_0001>
module attributes {stable_mosaic.version = 11 : i64} {
  func.func @_neighbor_agg_kernel(%arg0: i32, %arg1: i32, %arg2: memref<16x256xf32, #tpu.memory_space<vmem>>, %arg3: memref<256x32xf32, #tpu.memory_space<vmem>>, %arg4: memref<16x32xf32, #tpu.memory_space<vmem>>) attributes {dimension_semantics = [#tpu.dimension_semantics<parallel>, #tpu.dimension_semantics<arbitrary>], iteration_bounds = array<i64: 1, 1>, scalar_prefetch = 0 : i64, scratch_operands = 0 : i64, tpu.core_type = #tpu.core_type<tc>, window_params = [{transform_indices = @transform_0, window_bounds = array<i64: 16, 256>}, {transform_indices = @transform_1, window_bounds = array<i64: 256, 32>}, {transform_indices = @transform_2, window_bounds = array<i64: 16, 32>}]} {
    %c0 = arith.constant 0 : index
    %c0_0 = arith.constant 0 : index
    %0 = vector.load %arg2[%c0, %c0_0] : memref<16x256xf32, #tpu.memory_space<vmem>>, vector<16x256xf32>
    %c0_1 = arith.constant 0 : index
    %c0_2 = arith.constant 0 : index
    %1 = vector.load %arg3[%c0_1, %c0_2] : memref<256x32xf32, #tpu.memory_space<vmem>>, vector<256x32xf32>
    %cst = arith.constant dense<0.000000e+00> : vector<16x32xf32>
    %2 = tpu.matmul %0, %1, %cst {dimension_numbers = #tpu.dot_dimension_numbers<[1], [0], [0], [1], [0, 0, 1, 1], [], []>} : vector<16x256xf32>, vector<256x32xf32>, vector<16x32xf32> -> vector<16x32xf32>
    %c0_3 = arith.constant 0 : index
    %c0_4 = arith.constant 0 : index
    %3 = vector.load %arg4[%c0_3, %c0_4] : memref<16x32xf32, #tpu.memory_space<vmem>>, vector<16x32xf32>
    tpu.vector_store %arg4[%c0_3, %c0_4], %2 {strides = array<i32>} : memref<16x32xf32, #tpu.memory_space<vmem>>, vector<16x32xf32>,
    return
  }
  func.func @transform_0(%arg0: i32, %arg1: i32) -> (i32, i32) {
    %c0_i32 = arith.constant 0 : i32
    %c0_i32_0 = arith.constant 0 : i32
    return %arg0, %c0_i32 : i32, i32
  }
  func.func @transform_1(%arg0: i32, %arg1: i32) -> (i32, i32) {
    %c0_i32 = arith.constant 0 : i32
    %c0_i32_0 = arith.constant 0 : i32
    return %c0_i32, %arg1 : i32, i32
  }
  func.func @transform_2(%arg0: i32, %arg1: i32) -> (i32, i32) {
    %c0_i32 = arith.constant 0 : i32
    return %arg0, %arg1 : i32, i32
  }
}

</mosaic_0001>

<llo_original>
// kernel: tpu_custom_call.1
$region0: #{tpu_custom_call.1}
  #allocation0 [shape = 'u32[]', space=smem, size = 0x4, offset = 0x4, fixed_abs, tag = 'smem constant byte address 0x4 - core index']
  #allocation1 [shape = 'u32[144,128]{1,0:T(1,128)}', space=vmem, size = 0x12000, scoped, tag = 'internal scratch']
  %s0 = inlined_call_operand.vmem [shape: f32[16,256], index: 0, kind: input, shape index: {}]
  %s1 = inlined_call_operand.vmem [shape: f32[256,32], index: 1, kind: input, shape index: {}]
  %s2 = inlined_call_operand.hbm [shape: f32[16,32], index: 2, kind: output, shape index: {}]
  %s3 = sld [smem:[#allocation0]]
  $region18: #{tpu_custom_call.1} parent=0
    _
  %s5 = ssub.s32 1, %s3
  %s6 = scalar_select 0, %s5, %s3
  $region1: #{tpu_custom_call.1} parent=0
    #allocation2 [shape = 'u8[8192]{0}', space=vmem, size = 0x2000, scoped, tag = 'output window, operand 0, single buffered']
    #allocation3 [shape = 's32[1]{0}', space=sflag, size = 0x4, scoped, tag = 'scoped memory for tpu_custom_call.1']
    %7 = vsyncpa [#allocation3], 0
    // Predicated region
    $region2: #{tpu_custom_call.1} parent=1 // pred_check
      _
    $region3: #{tpu_custom_call.1} parent=1 // pred_check_branch
      %9 = sbr.rel (0) target = $region5
    $region4: #{tpu_custom_call.1} parent=1 // pred_region
      _
    $region5: #{tpu_custom_call.1} parent=1 // pred_fallthru
      _
    // Predicated region
    $region6: #{tpu_custom_call.1} parent=1 // pred_check
      _
    $region7: #{tpu_custom_call.1} parent=1 // pred_check_branch
      %11 = sbr.rel (0) target = $region9
    $region8: #{tpu_custom_call.1} parent=1 // pred_region
      _
    $region9: #{tpu_custom_call.1} parent=1 // pred_fallthru
      _
    %v12 = vld [vmem:[%s0] sm:$0xff]
    %v13 = vld [vmem:[%s0 + $0x8] sm:$0xff]
    %v14 = vld [vmem:[%s0 + $0x10] sm:$0xff]
    %v15 = vld [vmem:[%s0 + $0x18] sm:$0xff]
    %v16 = vld [vmem:[%s1] sm:$0xff]
    %v17 = vld [vmem:[%s1 + $0x8] sm:$0xff]
    %v18 = vld [vmem:[%s1 + $0x10] sm:$0xff]
    %v19 = vld [vmem:[%s1 + $0x18] sm:$0xff]
    %v20 = vld [vmem:[%s1 + $0x20] sm:$0xff]
    %v21 = vld [vmem:[%s1 + $0x28] sm:$0xff]
    %v22 = vld [vmem:[%s1 + $0x30] sm:$0xff]
    %v23 = vld [vmem:[%s1 + $0x38] sm:$0xff]
    %v24 = vld [vmem:[%s1 + $0x40] sm:$0xff]
    %v25 = vld [vmem:[%s1 + $0x48] sm:$0xff]
    %v26 = vld [vmem:[%s1 + $0x50] sm:$0xff]
    %v27 = vld [vmem:[%s1 + $0x58] sm:$0xff]
    %v28 = vld [vmem:[%s1 + $0x60] sm:$0xff]
    %v29 = vld [vmem:[%s1 + $0x68] sm:$0xff]
    %v30 = vld [vmem:[%s1 + $0x70] sm:$0xff]
    %v31 = vld [vmem:[%s1 + $0x78] sm:$0xff]
    %v32 = vld [vmem:[%s1 + $0x80] sm:$0xff]
    %v33 = vld [vmem:[%s1 + $0x88] sm:$0xff]
    %v34 = vld [vmem:[%s1 + $0x90] sm:$0xff]
    %v35 = vld [vmem:[%s1 + $0x98] sm:$0xff]
    %v36 = vld [vmem:[%s1 + $0xa0] sm:$0xff]
    %v37 = vld [vmem:[%s1 + $0xa8] sm:$0xff]
    %v38 = vld [vmem:[%s1 + $0xb0] sm:$0xff]
    %v39 = vld [vmem:[%s1 + $0xb8] sm:$0xff]
    %v40 = vld [vmem:[%s1 + $0xc0] sm:$0xff]
    %v41 = vld [vmem:[%s1 + $0xc8] sm:$0xff]
    %v42 = vld [vmem:[%s1 + $0xd0] sm:$0xff]
    %v43 = vld [vmem:[%s1 + $0xd8] sm:$0xff]
    %v44 = vld [vmem:[%s1 + $0xe0] sm:$0xff]
    %v45 = vld [vmem:[%s1 + $0xe8] sm:$0xff]
    %v46 = vld [vmem:[%s1 + $0xf0] sm:$0xff]
    %v47 = vld [vmem:[%s1 + $0xf8] sm:$0xff]
    %48 = vmatprep.subr.mxu0 0.0
    %49 = vmatpush1.msra.mxu0 %v16
    %50 = vmatprep.subr.mxu0 0.0
    %51 = vmatpush1.msra.mxu0 %v17
    %52 = vmatprep.subr.mxu0 0.0
    %53 = vmatpush1.msra.mxu0 %v18
    %54 = vmatprep.subr.mxu0 0.0
    %55 = vmatpush1.msra.mxu0 %v19
    %56 = vmatprep.subr.mxu0 0.0
    %57 = vmatpush1.msra.mxu0 %v20
    %58 = vmatprep.subr.mxu0 0.0
    %59 = vmatpush1.msra.mxu0 %v21
    %60 = vmatprep.subr.mxu0 0.0
    %61 = vmatpush1.msra.mxu0 %v22
    %62 = vmatprep.subr.mxu0 0.0
    %63 = vmatpush1.msra.mxu0 %v23
    %64 = vmatprep.subr.mxu0 0.0
    %65 = vmatpush1.msra.mxu0 %v24
    %66 = vmatprep.subr.mxu0 0.0
    %67 = vmatpush1.msra.mxu0 %v25
    %68 = vmatprep.subr.mxu0 0.0
    %69 = vmatpush1.msra.mxu0 %v26
    %70 = vmatprep.subr.mxu0 0.0
    %71 = vmatpush1.msra.mxu0 %v27
    %72 = vmatprep.subr.mxu0 0.0
    %73 = vmatpush1.msra.mxu0 %v28
    %74 = vmatprep.subr.mxu0 0.0
    %75 = vmatpush1.msra.mxu0 %v29
    %76 = vmatprep.subr.mxu0 0.0
    %77 = vmatpush1.msra.mxu0 %v30
    %78 = vmatprep.subr.mxu0 0.0
    %79 = vmatpush1.msra.mxu0 %v31
    %80 = vmatprep.subr.mxu0 0.0
    %81 = vmatpush1.msra.mxu0 %v32
    %82 = vmatprep.subr.mxu0 0.0
    %83 = vmatpush1.msra.mxu0 %v33
    %84 = vmatprep.subr.mxu0 0.0
    %85 = vmatpush1.msra.mxu0 %v34
    %86 = vmatprep.subr.mxu0 0.0
    %87 = vmatpush1.msra.mxu0 %v35
    %88 = vmatprep.subr.mxu0 0.0
    %89 = vmatpush1.msra.mxu0 %v36
    %90 = vmatprep.subr.mxu0 0.0
    %91 = vmatpush1.msra.mxu0 %v37
    %92 = vmatprep.subr.mxu0 0.0
    %93 = vmatpush1.msra.mxu0 %v38
    %94 = vmatprep.subr.mxu0 0.0
    %95 = vmatpush1.msra.mxu0 %v39
    %96 = vmatprep.subr.mxu0 0.0
    %97 = vmatpush1.msra.mxu0 %v40
    %98 = vmatprep.subr.mxu0 0.0
    %99 = vmatpush1.msra.mxu0 %v41
    %100 = vmatprep.subr.mxu0 0.0
    %101 = vmatpush1.msra.mxu0 %v42
    %102 = vmatprep.subr.mxu0 0.0
    %103 = vmatpush1.msra.mxu0 %v43
    %104 = vmatprep.subr.mxu0 0.0
    %105 = vmatpush1.msra.mxu0 %v44
    %106 = vmatprep.subr.mxu0 0.0
    %107 = vmatpush1.msra.mxu0 %v45
    %108 = vmatprep.subr.mxu0 0.0
    %109 = vmatpush1.msra.mxu0 %v46
    %110 = vmatprep.subr.mxu0 0.0
    %111 = vmatpush1.msra.mxu0 %v47
    %112 = vmatprep.mubr.f32.mxu0 %v13
    %113 = vmatmul.mubr.f32.gmra.mrb[0].mxu0 %v12
    %v114 = vpop.f32.mrb[0].mxu0
    %v115 = vadd.f32 0.0, %v114
    %v116 = vpop.f32.mrb[0].mxu0
    %117 = vmatprep.mubr.f32.mxu0 %v15
    %118 = vmatmul.mubr.f32.gmra.mrb[0].mxu0 %v14
    %v119 = vpop.f32.mrb[0].mxu0
    %v120 = vadd.f32 0.0, %v119
    %v121 = vpop.f32.mrb[0].mxu0
    %122 = vdwg.mxu0
    %vm123 = vcmask 261120
    %124 = vst.msk [vmem:[#allocation2] sm:$0xff] %vm123, %v115
    %125 = vst.msk [vmem:[#allocation2 + $0x8] sm:$0xff] %vm123, %v120
    // Predicated region
    $region10: #{tpu_custom_call.1} parent=1 // pred_check
      _
    $region11: #{tpu_custom_call.1} parent=1 // pred_check_branch
      %127 = sbr.rel (0) target = $region13
    $region12: #{tpu_custom_call.1} parent=1 // pred_region
      %s129 = ssub.s32 256, 256
      %130 = vsyncadd [#allocation3], %s129
      %s131 = sshll.u32 [#allocation2], 4
      %s132 = int_to_ptr.vmem [resolvable:$true] %s131
      %137 = dma.vmem_to_hbm [thread:$0]  %s132, 256, %s2, [#allocation3], 128, 128, 8
    $region13: #{tpu_custom_call.1} parent=1 // pred_fallthru
      _
    // Predicated region
    $region14: #{tpu_custom_call.1} parent=1 // pred_check
      _
    $region15: #{tpu_custom_call.1} parent=1 // pred_check_branch
      %139 = sbr.rel (0) target = $region17
    $region16: #{tpu_custom_call.1} parent=1 // pred_region
      %140 = dma.done [#allocation3], 256
    $region17: #{tpu_custom_call.1} parent=1 // pred_fallthru
      _
    %141 = vsyncpa [#allocation3], 1

</llo_original>
